<compile_context>
chip_gen: v6e
topology: v6e:2x2x1
jax: 0.10.0
libtpu: 0.0.40
codegen_flags: <defaults>
</compile_context>

<pallas_src>
import jax
import jax.numpy as jnp
from jax.experimental import pallas as pl
from jax.experimental.pallas import tpu as pltpu

_LANES = 128
_SUBLANES = 8
_BASE_BLOCK_ROWS = 4096      # f32: 4096 x 128 x 4B = 2 MiB per input per block
_FALLBACK_ELEMS = 64 * 1024  # below this, a plain XLA reduction fusion wins
_FOLD = 4                    # independent (8,128) partial accumulators per block


def _build_dice_kernel(block_rows):
    """Kernel closed over static tiling parameters.  All blocks are full."""
    assert block_rows % (_FOLD * _SUBLANES) == 0
    outer = block_rows // (_FOLD * _SUBLANES)

    def kernel(x_ref, y_ref, xy_ref, s_ref):
        @pl.when(pl.program_id(1) == 0)
        def _():
            xy_ref[...] = jnp.zeros_like(xy_ref)
            s_ref[...] = jnp.zeros_like(s_ref)

        x = x_ref[...].astype(jnp.float32)
        y = y_ref[...].astype(jnp.float32)

        # Two-level leading-axis reduction: the first sum keeps _FOLD
        # independent (8,128) partials (ILP across the 4 VALU slots), the
        # second folds them.  Pure VPU adds; the cross-lane reduce to a scalar
        # is deferred to the wrapper (runs exactly once).
        prod = jnp.sum((x * y).reshape(outer, _FOLD * _SUBLANES, _LANES), axis=0)
        ssum = jnp.sum((x + y).reshape(outer, _FOLD * _SUBLANES, _LANES), axis=0)
        xy_ref[...] += jnp.sum(prod.reshape(_FOLD, _SUBLANES, _LANES), axis=0)
        s_ref[...] += jnp.sum(ssum.reshape(_FOLD, _SUBLANES, _LANES), axis=0)

    return kernel


def dice_loss(pred, target):
    """Dice loss matching the PyTorch DiceLoss.forward semantics.

    pred, target: same shape (e.g. NCHW).  Returns a float32 scalar.
    """
    assert pred.shape == target.shape
    smooth = jnp.float32(1.0)

    xf = pred.reshape(-1)
    yf = target.reshape(-1)
    n = xf.shape[0]

    if n < _FALLBACK_ELEMS:
        # Tiny input: pallas launch + pipeline warm-up is pure overhead.
        xd = xf.astype(jnp.float32)
        yd = yf.astype(jnp.float32)
        inter = jnp.sum(xd * yd)
        total = jnp.sum(xd) + jnp.sum(yd)
        return 1.0 - (2.0 * inter + smooth) / (total + smooth)

    tail = n % _LANES
    aligned = n - tail
    rows = aligned // _LANES  # >= 511 given the fallback threshold

    # Keep ~2 MiB of HBM per input per block regardless of dtype width; round
    # block_rows to a multiple of 32 so the (outer, 32, 128) regroup is legal
    # and narrow-dtype packed sublane tiling (16/32) is respected.
    itemsize = max(jnp.dtype(pred.dtype).itemsize, jnp.dtype(target.dtype).itemsize)
    max_rows = _BASE_BLOCK_ROWS * max(1, 4 // int(itemsize))
    block_rows = min(max_rows, (rows // 32) * 32)
    num_blocks = rows // block_rows

    # Two independent partial reductions whenever possible so v7x's two
    # TensorCores each take half; the leftover odd block (if any) plus the
    # sub-128 tail are handled by a tiny fused XLA reduce below.
    parts = 2 if num_blocks >= 2 else 1
    blocks_per_part = num_blocks // parts
    kernel_rows = parts * blocks_per_part * block_rows
    kernel_elems = kernel_rows * _LANES

    if tail:
        # Ragged flat length: the pallas operand needs a dense 2-D view, so
        # materialize only the kernel-covered prefix once.
        x2 = xf[:kernel_elems].reshape(kernel_rows, _LANES)
        y2 = yf[:kernel_elems].reshape(kernel_rows, _LANES)
    else:
        # Free bitcast reshape of the original buffer; no copy.  The kernel
        # grid simply never touches rows >= kernel_rows.
        x2 = xf.reshape(rows, _LANES)
        y2 = yf.reshape(rows, _LANES)

    kernel = _build_dice_kernel(block_rows)

    in_spec = pl.BlockSpec(
        (block_rows, _LANES),
        lambda p, i: (p * blocks_per_part + i, 0))
    out_spec = pl.BlockSpec((_SUBLANES, _LANES), lambda p, i: (p, 0))
    out_sds = jax.ShapeDtypeStruct((parts * _SUBLANES, _LANES), jnp.float32)

    bytes_accessed = (
        kernel_elems * (jnp.dtype(pred.dtype).itemsize
                        + jnp.dtype(target.dtype).itemsize)
        + 2 * parts * _SUBLANES * _LANES * 4)

    partial_xy, partial_s = pl.pallas_call(
        kernel,
        out_shape=(out_sds, out_sds),
        grid_spec=pltpu.PrefetchScalarGridSpec(
            num_scalar_prefetch=0,
            grid=(parts, blocks_per_part),
            in_specs=[in_spec, in_spec],
            out_specs=(out_spec, out_spec),
        ),
        compiler_params=pltpu.CompilerParams(
            dimension_semantics=("parallel", "arbitrary"),
            vmem_limit_bytes=32 * 1024 * 1024,
        ),
        cost_estimate=pl.CostEstimate(
            flops=4 * kernel_elems,
            transcendentals=0,
            bytes_accessed=int(bytes_accessed)),
    )(x2, y2)

    intersection = jnp.sum(partial_xy)
    total = jnp.sum(partial_s)

    # Rows not covered by the kernel grid (< 2 blocks worth): fused XLA reduce
    # straight off the original flat buffer (no materialized copy).
    if kernel_rows < rows:
        xr = xf[kernel_elems:aligned].astype(jnp.float32)
        yr = yf[kernel_elems:aligned].astype(jnp.float32)
        intersection = intersection + jnp.sum(xr * yr)
        total = total + jnp.sum(xr) + jnp.sum(yr)
    # Sub-128-element tail.
    if tail:
        xt = xf[aligned:].astype(jnp.float32)
        yt = yf[aligned:].astype(jnp.float32)
        intersection = intersection + jnp.sum(xt * yt)
        total = total + jnp.sum(xt) + jnp.sum(yt)

    return 1.0 - (2.0 * intersection + smooth) / (total + smooth)


def _dice_loss_ref(pred, target):
    smooth = 1.0
    xf = pred.reshape(-1).astype(jnp.float32)
    yf = target.reshape(-1).astype(jnp.float32)
    inter = jnp.sum(xf * yf)
    return 1.0 - (2.0 * inter + smooth) / (jnp.sum(xf) + jnp.sum(yf) + smooth)


if __name__ == "__main__":
    key = jax.random.PRNGKey(0)

    # Primary module-like shape plus a few sizes that exercise every code
    # path: XLA fallback, single-block kernel, ragged tail + remainder, and
    # the two-part ("parallel") split.
    shapes = [
        (2, 4, 16, 16),      # tiny -> fallback path
        (2, 4, 96, 112),     # single full block, no remainder
        (3, 5, 67, 67),      # ragged flat length: kernel + remainder + tail
        (2, 8, 256, 256),    # two blocks -> parts=2 split
    ]

    ok = True
    for shape in shapes:
        key, k1, k2 = jax.random.split(key, 3)
        pred = jax.nn.sigmoid(jax.random.normal(k1, shape, dtype=jnp.float32))
        target = (jax.random.uniform(k2, shape) > 0.5).astype(jnp.float32)

        loss = dice_loss(pred, target)
        jax.block_until_ready(loss)

        ref = _dice_loss_ref(pred, target)
        if not jnp.allclose(loss, ref, rtol=1e-4, atol=1e-6):
            ok = False
            print("MISMATCH", shape, float(loss), float(ref))

    if ok:
        print("KERNEL_OK")
</pallas_src>

<mosaic_0001>
module attributes {stable_mosaic.version = 11 : i64} {
  func.func @kernel(%arg0: i32, %arg1: i32, %arg2: memref<672x128xf32, #tpu.memory_space<vmem>>, %arg3: memref<672x128xf32, #tpu.memory_space<vmem>>, %arg4: memref<8x128xf32, #tpu.memory_space<vmem>>, %arg5: memref<8x128xf32, #tpu.memory_space<vmem>>) attributes {dimension_semantics = [#tpu.dimension_semantics<parallel>, #tpu.dimension_semantics<arbitrary>], iteration_bounds = array<i64: 1, 1>, scalar_prefetch = 0 : i64, scratch_operands = 0 : i64, tpu.core_type = #tpu.core_type<tc>, window_params = [{transform_indices = @transform_0, window_bounds = array<i64: 672, 128>}, {transform_indices = @transform_1, window_bounds = array<i64: 672, 128>}, {transform_indices = @transform_2, window_bounds = array<i64: 8, 128>}, {transform_indices = @transform_3, window_bounds = array<i64: 8, 128>}]} {
    %c0_i32 = arith.constant 0 : i32
    %0 = arith.cmpi eq, %arg1, %c0_i32 : i32
    %1 = arith.extui %0 : i1 to i32
    %c0_i32_0 = arith.constant 0 : i32
    %2 = arith.cmpi ne, %1, %c0_i32_0 : i32
    scf.if %2 {
      %cst_15 = arith.constant 0.000000e+00 : f32
      %21 = vector.broadcast %cst_15 : f32 to vector<8x128xf32>
      %c0_16 = arith.constant 0 : index
      %c0_17 = arith.constant 0 : index
      %22 = vector.load %arg4[%c0_16, %c0_17] : memref<8x128xf32, #tpu.memory_space<vmem>>, vector<8x128xf32>
      tpu.vector_store %arg4[%c0_16, %c0_17], %21 {strides = array<i32>} : memref<8x128xf32, #tpu.memory_space<vmem>>, vector<8x128xf32>,
      %cst_18 = arith.constant 0.000000e+00 : f32
      %23 = vector.broadcast %cst_18 : f32 to vector<8x128xf32>
      %c0_19 = arith.constant 0 : index
      %c0_20 = arith.constant 0 : index
      %24 = vector.load %arg5[%c0_19, %c0_20] : memref<8x128xf32, #tpu.memory_space<vmem>>, vector<8x128xf32>
      tpu.vector_store %arg5[%c0_19, %c0_20], %23 {strides = array<i32>} : memref<8x128xf32, #tpu.memory_space<vmem>>, vector<8x128xf32>,
    } else {
    }
    %c0 = arith.constant 0 : index
    %c0_1 = arith.constant 0 : index
    %3 = vector.load %arg2[%c0, %c0_1] : memref<672x128xf32, #tpu.memory_space<vmem>>, vector<672x128xf32>
    %c0_2 = arith.constant 0 : index
    %c0_3 = arith.constant 0 : index
    %4 = vector.load %arg3[%c0_2, %c0_3] : memref<672x128xf32, #tpu.memory_space<vmem>>, vector<672x128xf32>
    %5 = arith.mulf %3, %4 : vector<672x128xf32>
    %6 = vector.shape_cast %5 : vector<672x128xf32> to vector<21x32x128xf32>
    %cst = arith.constant dense<0.000000e+00> : vector<32x128xf32>
    %7 = vector.multi_reduction <add>, %6, %cst [0] : vector<21x32x128xf32> to vector<32x128xf32>
    %8 = arith.addf %3, %4 : vector<672x128xf32>
    %9 = vector.shape_cast %8 : vector<672x128xf32> to vector<21x32x128xf32>
    %cst_4 = arith.constant dense<0.000000e+00> : vector<32x128xf32>
    %10 = vector.multi_reduction <add>, %9, %cst_4 [0] : vector<21x32x128xf32> to vector<32x128xf32>
    %c0_5 = arith.constant 0 : index
    %c0_6 = arith.constant 0 : index
    %11 = vector.load %arg4[%c0_5, %c0_6] : memref<8x128xf32, #tpu.memory_space<vmem>>, vector<8x128xf32>
    %12 = vector.shape_cast %7 : vector<32x128xf32> to vector<4x8x128xf32>
    %cst_7 = arith.constant dense<0.000000e+00> : vector<8x128xf32>
    %13 = vector.multi_reduction <add>, %12, %cst_7 [0] : vector<4x8x128xf32> to vector<8x128xf32>
    %14 = arith.addf %11, %13 : vector<8x128xf32>
    %c0_8 = arith.constant 0 : index
    %c0_9 = arith.constant 0 : index
    %15 = vector.load %arg4[%c0_8, %c0_9] : memref<8x128xf32, #tpu.memory_space<vmem>>, vector<8x128xf32>
    tpu.vector_store %arg4[%c0_8, %c0_9], %14 {strides = array<i32>} : memref<8x128xf32, #tpu.memory_space<vmem>>, vector<8x128xf32>,
    %c0_10 = arith.constant 0 : index
    %c0_11 = arith.constant 0 : index
    %16 = vector.load %arg5[%c0_10, %c0_11] : memref<8x128xf32, #tpu.memory_space<vmem>>, vector<8x128xf32>
    %17 = vector.shape_cast %10 : vector<32x128xf32> to vector<4x8x128xf32>
    %cst_12 = arith.constant dense<0.000000e+00> : vector<8x128xf32>
    %18 = vector.multi_reduction <add>, %17, %cst_12 [0] : vector<4x8x128xf32> to vector<8x128xf32>
    %19 = arith.addf %16, %18 : vector<8x128xf32>
    %c0_13 = arith.constant 0 : index
    %c0_14 = arith.constant 0 : index
    %20 = vector.load %arg5[%c0_13, %c0_14] : memref<8x128xf32, #tpu.memory_space<vmem>>, vector<8x128xf32>
    tpu.vector_store %arg5[%c0_13, %c0_14], %19 {strides = array<i32>} : memref<8x128xf32, #tpu.memory_space<vmem>>, vector<8x128xf32>,
    return
  }
  func.func @transform_0(%arg0: i32, %arg1: i32) -> (i32, i32) {
    %c1_i32 = arith.constant 1 : i32
    %0 = arith.muli %arg0, %c1_i32 : i32
    %1 = arith.addi %0, %arg1 : i32
    %c0_i32 = arith.constant 0 : i32
    %c0_i32_0 = arith.constant 0 : i32
    return %1, %c0_i32 : i32, i32
  }
  func.func @transform_1(%arg0: i32, %arg1: i32) -> (i32, i32) {
    %c1_i32 = arith.constant 1 : i32
    %0 = arith.muli %arg0, %c1_i32 : i32
    %1 = arith.addi %0, %arg1 : i32
    %c0_i32 = arith.constant 0 : i32
    %c0_i32_0 = arith.constant 0 : i32
    return %1, %c0_i32 : i32, i32
  }
  func.func @transform_2(%arg0: i32, %arg1: i32) -> (i32, i32) {
    %c0_i32 = arith.constant 0 : i32
    %c0_i32_0 = arith.constant 0 : i32
    return %arg0, %c0_i32 : i32, i32
  }
  func.func @transform_3(%arg0: i32, %arg1: i32) -> (i32, i32) {
    %c0_i32 = arith.constant 0 : i32
    %c0_i32_0 = arith.constant 0 : i32
    return %arg0, %c0_i32 : i32, i32
  }
}

</mosaic_0001>

<llo_original>
// kernel: tpu_custom_call.1
$region0: #{tpu_custom_call.1}
  #allocation0 [shape = 'u32[]', space=smem, size = 0x4, offset = 0x4, fixed_abs, tag = 'smem constant byte address 0x4 - core index']
  #allocation1 [shape = 'u32[144,128]{1,0:T(1,128)}', space=vmem, size = 0x12000, scoped, tag = 'internal scratch']
  %s0 = inlined_call_operand.hbm [shape: f32[672,128], index: 0, kind: input, shape index: {}]
  %s1 = inlined_call_operand.hbm [shape: f32[672,128], index: 1, kind: input, shape index: {}]
  %s2 = inlined_call_operand.hbm [shape: f32[8,128], index: 2, kind: output, shape index: {0}]
  %s3 = inlined_call_operand.hbm [shape: f32[8,128], index: 3, kind: output, shape index: {1}]
  %4 = xla_tuple %s2, %s3
  %s5 = sld [smem:[#allocation0]]
  $region38: #{tpu_custom_call.1} parent=0
    _
  %s7 = ssub.s32 1, %s5
  %s8 = scalar_select 0, %s7, %s5
  $region1: #{tpu_custom_call.1} parent=0
    #allocation2 [shape = 'u8[344064]{0}', space=vmem, size = 0x54000, scoped, tag = 'input window, operand 0, single buffered']
    #allocation3 [shape = 's32[1]{0}', space=sflag, size = 0x4, scoped, tag = 'scoped memory for tpu_custom_call.1']
    #allocation4 [shape = 's32[1]{0}', space=sflag, size = 0x4, scoped, tag = 'scoped memory for tpu_custom_call.1']
    #allocation5 [shape = 'u8[344064]{0}', space=vmem, size = 0x54000, scoped, tag = 'input window, operand 1, single buffered']
    #allocation6 [shape = 's32[1]{0}', space=sflag, size = 0x4, scoped, tag = 'scoped memory for tpu_custom_call.1']
    #allocation7 [shape = 'u8[4096]{0}', space=vmem, size = 0x1000, scoped, tag = 'output window, operand 0, single buffered']
    #allocation8 [shape = 'u8[4096]{0}', space=vmem, size = 0x1000, scoped, tag = 'output window, operand 1, single buffered']
    #allocation9 [shape = 's32[1]{0}', space=sflag, size = 0x4, scoped, tag = 'scoped memory for tpu_custom_call.1']
    %9 = vsyncpa [#allocation3], 0
    %10 = vsyncpa [#allocation6], 0
    %11 = vsyncpa [#allocation4], 0
    %12 = vsyncpa [#allocation9], 0
    // Predicated region
    $region2: #{tpu_custom_call.1} parent=1 // pred_check
      _
    $region3: #{tpu_custom_call.1} parent=1 // pred_check_branch
      %14 = sbr.rel (0) target = $region5
    $region4: #{tpu_custom_call.1} parent=1 // pred_region
      %s15 = sadd.s32 0, 0
      %s16 = smul.u32 84, %s15
      %s18 = ssub.s32 10752, 10752
      %19 = vsyncadd [#allocation3], %s18
      %s20 = smul.addr %s16, 128
      %s21 = scalar_lea.hbm %s0, %s20
      %s22 = sshll.u32 [#allocation2], 4
      %s23 = int_to_ptr.vmem [resolvable:$true] %s22
      %28 = dma.hbm_to_vmem [thread:$0]  %s21, 10752, %s23, [#allocation3], 128, 128, 8
    $region5: #{tpu_custom_call.1} parent=1 // pred_fallthru
      _
    // Predicated region
    $region6: #{tpu_custom_call.1} parent=1 // pred_check
      _
    $region7: #{tpu_custom_call.1} parent=1 // pred_check_branch
      %30 = sbr.rel (0) target = $region9
    $region8: #{tpu_custom_call.1} parent=1 // pred_region
      %s31 = sadd.s32 0, 0
      %s32 = smul.u32 84, %s31
      %s34 = ssub.s32 10752, 10752
      %35 = vsyncadd [#allocation6], %s34
      %s36 = smul.addr %s32, 128
      %s37 = scalar_lea.hbm %s1, %s36
      %s38 = sshll.u32 [#allocation5], 4
      %s39 = int_to_ptr.vmem [resolvable:$true] %s38
      %44 = dma.hbm_to_vmem [thread:$0]  %s37, 10752, %s39, [#allocation6], 128, 128, 8
    $region9: #{tpu_custom_call.1} parent=1 // pred_fallthru
      _
    // Predicated region
    $region10: #{tpu_custom_call.1} parent=1 // pred_check
      _
    $region11: #{tpu_custom_call.1} parent=1 // pred_check_branch
      %46 = sbr.rel (0) target = $region13
    $region12: #{tpu_custom_call.1} parent=1 // pred_region
      %47 = dma.done [#allocation3], 10752
    $region13: #{tpu_custom_call.1} parent=1 // pred_fallthru
      _
    // Predicated region
    $region14: #{tpu_custom_call.1} parent=1 // pred_check
      _
    $region15: #{tpu_custom_call.1} parent=1 // pred_check_branch
      %49 = sbr.rel (0) target = $region17
    $region16: #{tpu_custom_call.1} parent=1 // pred_region
      %50 = dma.done [#allocation6], 10752
    $region17: #{tpu_custom_call.1} parent=1 // pred_fallthru
      _
    %s51 = sadd.s32 0, 0
    %s52 = smul.u32 84, %s51
    %s53 = sadd.s32 0, 0
    %s54 = smul.u32 84, %s53
    %p55 = scmp.eq.s32.totalorder 0, 0
    // Predicated region
    $region18: #{tpu_custom_call.1} parent=1 // pred_check
      %p56 = pneg %p55
    $region19: #{tpu_custom_call.1} parent=1 // pred_check_branch
      %58 = sbr.rel (%p56) target = $region21
    $region20: #{tpu_custom_call.1} parent=1 // pred_region
      %59 = vst [vmem:[#allocation7] sm:$0xff] 0.0
      %60 = vst [vmem:[#allocation8] sm:$0xff] 0.0
    $region21: #{tpu_custom_call.1} parent=1 // pred_fallthru
      _
    %v61 = vld [vmem:[#allocation2] sm:$0xff]
    %v62 = vld [vmem:[#allocation2 + $0x8] sm:$0xff]
    %v63 = vld [vmem:[#allocation2 + $0x10] sm:$0xff]
    %v64 = vld [vmem:[#allocation2 + $0x18] sm:$0xff]
    %v65 = vld [vmem:[#allocation2 + $0x20] sm:$0xff]
    %v66 = vld [vmem:[#allocation2 + $0x28] sm:$0xff]
    %v67 = vld [vmem:[#allocation2 + $0x30] sm:$0xff]
    %v68 = vld [vmem:[#allocation2 + $0x38] sm:$0xff]
    %v69 = vld [vmem:[#allocation2 + $0x40] sm:$0xff]
    %v70 = vld [vmem:[#allocation2 + $0x48] sm:$0xff]
    %v71 = vld [vmem:[#allocation2 + $0x50] sm:$0xff]
    %v72 = vld [vmem:[#allocation2 + $0x58] sm:$0xff]
    %v73 = vld [vmem:[#allocation2 + $0x60] sm:$0xff]
    %v74 = vld [vmem:[#allocation2 + $0x68] sm:$0xff]
    %v75 = vld [vmem:[#allocation2 + $0x70] sm:$0xff]
    %v76 = vld [vmem:[#allocation2 + $0x78] sm:$0xff]
    %v77 = vld [vmem:[#allocation2 + $0x80] sm:$0xff]
    %v78 = vld [vmem:[#allocation2 + $0x88] sm:$0xff]
    %v79 = vld [vmem:[#allocation2 + $0x90] sm:$0xff]
    %v80 = vld [vmem:[#allocation2 + $0x98] sm:$0xff]
    %v81 = vld [vmem:[#allocation2 + $0xa0] sm:$0xff]
    %v82 = vld [vmem:[#allocation2 + $0xa8] sm:$0xff]
    %v83 = vld [vmem:[#allocation2 + $0xb0] sm:$0xff]
    %v84 = vld [vmem:[#allocation2 + $0xb8] sm:$0xff]
    %v85 = vld [vmem:[#allocation2 + $0xc0] sm:$0xff]
    %v86 = vld [vmem:[#allocation2 + $0xc8] sm:$0xff]
    %v87 = vld [vmem:[#allocation2 + $0xd0] sm:$0xff]
    %v88 = vld [vmem:[#allocation2 + $0xd8] sm:$0xff]
    %v89 = vld [vmem:[#allocation2 + $0xe0] sm:$0xff]
    %v90 = vld [vmem:[#allocation2 + $0xe8] sm:$0xff]
    %v91 = vld [vmem:[#allocation2 + $0xf0] sm:$0xff]
    %v92 = vld [vmem:[#allocation2 + $0xf8] sm:$0xff]
    %v93 = vld [vmem:[#allocation2 + $0x100] sm:$0xff]
    %v94 = vld [vmem:[#allocation2 + $0x108] sm:$0xff]
    %v95 = vld [vmem:[#allocation2 + $0x110] sm:$0xff]
    %v96 = vld [vmem:[#allocation2 + $0x118] sm:$0xff]
    %v97 = vld [vmem:[#allocation2 + $0x120] sm:$0xff]
    %v98 = vld [vmem:[#allocation2 + $0x128] sm:$0xff]
    %v99 = vld [vmem:[#allocation2 + $0x130] sm:$0xff]
    %v100 = vld [vmem:[#allocation2 + $0x138] sm:$0xff]
    %v101 = vld [vmem:[#allocation2 + $0x140] sm:$0xff]
    %v102 = vld [vmem:[#allocation2 + $0x148] sm:$0xff]
    %v103 = vld [vmem:[#allocation2 + $0x150] sm:$0xff]
    %v104 = vld [vmem:[#allocation2 + $0x158] sm:$0xff]
    %v105 = vld [vmem:[#allocation2 + $0x160] sm:$0xff]
    %v106 = vld [vmem:[#allocation2 + $0x168] sm:$0xff]
    %v107 = vld [vmem:[#allocation2 + $0x170] sm:$0xff]
    %v108 = vld [vmem:[#allocation2 + $0x178] sm:$0xff]
    %v109 = vld [vmem:[#allocation2 + $0x180] sm:$0xff]
    %v110 = vld [vmem:[#allocation2 + $0x188] sm:$0xff]
    %v111 = vld [vmem:[#allocation2 + $0x190] sm:$0xff]
    %v112 = vld [vmem:[#allocation2 + $0x198] sm:$0xff]
    %v113 = vld [vmem:[#allocation2 + $0x1a0] sm:$0xff]
    %v114 = vld [vmem:[#allocation2 + $0x1a8] sm:$0xff]
    %v115 = vld [vmem:[#allocation2 + $0x1b0] sm:$0xff]
    %v116 = vld [vmem:[#allocation2 + $0x1b8] sm:$0xff]
    %v117 = vld [vmem:[#allocation2 + $0x1c0] sm:$0xff]
    %v118 = vld [vmem:[#allocation2 + $0x1c8] sm:$0xff]
    %v119 = vld [vmem:[#allocation2 + $0x1d0] sm:$0xff]
    %v120 = vld [vmem:[#allocation2 + $0x1d8] sm:$0xff]
    %v121 = vld [vmem:[#allocation2 + $0x1e0] sm:$0xff]
    %v122 = vld [vmem:[#allocation2 + $0x1e8] sm:$0xff]
    %v123 = vld [vmem:[#allocation2 + $0x1f0] sm:$0xff]
    %v124 = vld [vmem:[#allocation2 + $0x1f8] sm:$0xff]
    %v125 = vld [vmem:[#allocation2 + $0x200] sm:$0xff]
    %v126 = vld [vmem:[#allocation2 + $0x208] sm:$0xff]
    %v127 = vld [vmem:[#allocation2 + $0x210] sm:$0xff]
    %v128 = vld [vmem:[#allocation2 + $0x218] sm:$0xff]
    %v129 = vld [vmem:[#allocation2 + $0x220] sm:$0xff]
    %v130 = vld [vmem:[#allocation2 + $0x228] sm:$0xff]
    %v131 = vld [vmem:[#allocation2 + $0x230] sm:$0xff]
    %v132 = vld [vmem:[#allocation2 + $0x238] sm:$0xff]
    %v133 = vld [vmem:[#allocation2 + $0x240] sm:$0xff]
    %v134 = vld [vmem:[#allocation2 + $0x248] sm:$0xff]
    %v135 = vld [vmem:[#allocation2 + $0x250] sm:$0xff]
    %v136 = vld [vmem:[#allocation2 + $0x258] sm:$0xff]
    %v137 = vld [vmem:[#allocation2 + $0x260] sm:$0xff]
    %v138 = vld [vmem:[#allocation2 + $0x268] sm:$0xff]
    %v139 = vld [vmem:[#allocation2 + $0x270] sm:$0xff]
    %v140 = vld [vmem:[#allocation2 + $0x278] sm:$0xff]
    %v141 = vld [vmem:[#allocation2 + $0x280] sm:$0xff]
    %v142 = vld [vmem:[#allocation2 + $0x288] sm:$0xff]
    %v143 = vld [vmem:[#allocation2 + $0x290] sm:$0xff]
    %v144 = vld [vmem:[#allocation2 + $0x298] sm:$0xff]
    %v145 = vld [vmem:[#allocation5] sm:$0xff]
    %v146 = vld [vmem:[#allocation5 + $0x8] sm:$0xff]
    %v147 = vld [vmem:[#allocation5 + $0x10] sm:$0xff]
    %v148 = vld [vmem:[#allocation5 + $0x18] sm:$0xff]
    %v149 = vld [vmem:[#allocation5 + $0x20] sm:$0xff]
    %v150 = vld [vmem:[#allocation5 + $0x28] sm:$0xff]
    %v151 = vld [vmem:[#allocation5 + $0x30] sm:$0xff]
    %v152 = vld [vmem:[#allocation5 + $0x38] sm:$0xff]
    %v153 = vld [vmem:[#allocation5 + $0x40] sm:$0xff]
    %v154 = vld [vmem:[#allocation5 + $0x48] sm:$0xff]
    %v155 = vld [vmem:[#allocation5 + $0x50] sm:$0xff]
    %v156 = vld [vmem:[#allocation5 + $0x58] sm:$0xff]
    %v157 = vld [vmem:[#allocation5 + $0x60] sm:$0xff]
    %v158 = vld [vmem:[#allocation5 + $0x68] sm:$0xff]
    %v159 = vld [vmem:[#allocation5 + $0x70] sm:$0xff]
    %v160 = vld [vmem:[#allocation5 + $0x78] sm:$0xff]
    %v161 = vld [vmem:[#allocation5 + $0x80] sm:$0xff]
    %v162 = vld [vmem:[#allocation5 + $0x88] sm:$0xff]
    %v163 = vld [vmem:[#allocation5 + $0x90] sm:$0xff]
    %v164 = vld [vmem:[#allocation5 + $0x98] sm:$0xff]
    %v165 = vld [vmem:[#allocation5 + $0xa0] sm:$0xff]
    %v166 = vld [vmem:[#allocation5 + $0xa8] sm:$0xff]
    %v167 = vld [vmem:[#allocation5 + $0xb0] sm:$0xff]
    %v168 = vld [vmem:[#allocation5 + $0xb8] sm:$0xff]
    %v169 = vld [vmem:[#allocation5 + $0xc0] sm:$0xff]
    %v170 = vld [vmem:[#allocation5 + $0xc8] sm:$0xff]
    %v171 = vld [vmem:[#allocation5 + $0xd0] sm:$0xff]
    %v172 = vld [vmem:[#allocation5 + $0xd8] sm:$0xff]
    %v173 = vld [vmem:[#allocation5 + $0xe0] sm:$0xff]
    %v174 = vld [vmem:[#allocation5 + $0xe8] sm:$0xff]
    %v175 = vld [vmem:[#allocation5 + $0xf0] sm:$0xff]
    %v176 = vld [vmem:[#allocation5 + $0xf8] sm:$0xff]
    %v177 = vld [vmem:[#allocation5 + $0x100] sm:$0xff]
    %v178 = vld [vmem:[#allocation5 + $0x108] sm:$0xff]
    %v179 = vld [vmem:[#allocation5 + $0x110] sm:$0xff]
    %v180 = vld [vmem:[#allocation5 + $0x118] sm:$0xff]
    %v181 = vld [vmem:[#allocation5 + $0x120] sm:$0xff]
    %v182 = vld [vmem:[#allocation5 + $0x128] sm:$0xff]
    %v183 = vld [vmem:[#allocation5 + $0x130] sm:$0xff]
    %v184 = vld [vmem:[#allocation5 + $0x138] sm:$0xff]
    %v185 = vld [vmem:[#allocation5 + $0x140] sm:$0xff]
    %v186 = vld [vmem:[#allocation5 + $0x148] sm:$0xff]
    %v187 = vld [vmem:[#allocation5 + $0x150] sm:$0xff]
    %v188 = vld [vmem:[#allocation5 + $0x158] sm:$0xff]
    %v189 = vld [vmem:[#allocation5 + $0x160] sm:$0xff]
    %v190 = vld [vmem:[#allocation5 + $0x168] sm:$0xff]
    %v191 = vld [vmem:[#allocation5 + $0x170] sm:$0xff]
    %v192 = vld [vmem:[#allocation5 + $0x178] sm:$0xff]
    %v193 = vld [vmem:[#allocation5 + $0x180] sm:$0xff]
    %v194 = vld [vmem:[#allocation5 + $0x188] sm:$0xff]
    %v195 = vld [vmem:[#allocation5 + $0x190] sm:$0xff]
    %v196 = vld [vmem:[#allocation5 + $0x198] sm:$0xff]
    %v197 = vld [vmem:[#allocation5 + $0x1a0] sm:$0xff]
    %v198 = vld [vmem:[#allocation5 + $0x1a8] sm:$0xff]
    %v199 = vld [vmem:[#allocation5 + $0x1b0] sm:$0xff]
    %v200 = vld [vmem:[#allocation5 + $0x1b8] sm:$0xff]
    %v201 = vld [vmem:[#allocation5 + $0x1c0] sm:$0xff]
    %v202 = vld [vmem:[#allocation5 + $0x1c8] sm:$0xff]
    %v203 = vld [vmem:[#allocation5 + $0x1d0] sm:$0xff]
    %v204 = vld [vmem:[#allocation5 + $0x1d8] sm:$0xff]
    %v205 = vld [vmem:[#allocation5 + $0x1e0] sm:$0xff]
    %v206 = vld [vmem:[#allocation5 + $0x1e8] sm:$0xff]
    %v207 = vld [vmem:[#allocation5 + $0x1f0] sm:$0xff]
    %v208 = vld [vmem:[#allocation5 + $0x1f8] sm:$0xff]
    %v209 = vld [vmem:[#allocation5 + $0x200] sm:$0xff]
    %v210 = vld [vmem:[#allocation5 + $0x208] sm:$0xff]
    %v211 = vld [vmem:[#allocation5 + $0x210] sm:$0xff]
    %v212 = vld [vmem:[#allocation5 + $0x218] sm:$0xff]
    %v213 = vld [vmem:[#allocation5 + $0x220] sm:$0xff]
    %v214 = vld [vmem:[#allocation5 + $0x228] sm:$0xff]
    %v215 = vld [vmem:[#allocation5 + $0x230] sm:$0xff]
    %v216 = vld [vmem:[#allocation5 + $0x238] sm:$0xff]
    %v217 = vld [vmem:[#allocation5 + $0x240] sm:$0xff]
    %v218 = vld [vmem:[#allocation5 + $0x248] sm:$0xff]
    %v219 = vld [vmem:[#allocation5 + $0x250] sm:$0xff]
    %v220 = vld [vmem:[#allocation5 + $0x258] sm:$0xff]
    %v221 = vld [vmem:[#allocation5 + $0x260] sm:$0xff]
    %v222 = vld [vmem:[#allocation5 + $0x268] sm:$0xff]
    %v223 = vld [vmem:[#allocation5 + $0x270] sm:$0xff]
    %v224 = vld [vmem:[#allocation5 + $0x278] sm:$0xff]
    %v225 = vld [vmem:[#allocation5 + $0x280] sm:$0xff]
    %v226 = vld [vmem:[#allocation5 + $0x288] sm:$0xff]
    %v227 = vld [vmem:[#allocation5 + $0x290] sm:$0xff]
    %v228 = vld [vmem:[#allocation5 + $0x298] sm:$0xff]
    %v229 = vmul.f32 %v61, %v145
    %v230 = vmul.f32 %v62, %v146
    %v231 = vmul.f32 %v63, %v147
    %v232 = vmul.f32 %v64, %v148
    %v233 = vmul.f32 %v65, %v149
    %v234 = vmul.f32 %v66, %v150
    %v235 = vmul.f32 %v67, %v151
    %v236 = vmul.f32 %v68, %v152
    %v237 = vmul.f32 %v69, %v153
    %v238 = vmul.f32 %v70, %v154
    %v239 = vmul.f32 %v71, %v155
    %v240 = vmul.f32 %v72, %v156
    %v241 = vmul.f32 %v73, %v157
    %v242 = vmul.f32 %v74, %v158
    %v243 = vmul.f32 %v75, %v159
    %v244 = vmul.f32 %v76, %v160
    %v245 = vmul.f32 %v77, %v161
    %v246 = vmul.f32 %v78, %v162
    %v247 = vmul.f32 %v79, %v163
    %v248 = vmul.f32 %v80, %v164
    %v249 = vmul.f32 %v81, %v165
    %v250 = vmul.f32 %v82, %v166
    %v251 = vmul.f32 %v83, %v167
    %v252 = vmul.f32 %v84, %v168
    %v253 = vmul.f32 %v85, %v169
    %v254 = vmul.f32 %v86, %v170
    %v255 = vmul.f32 %v87, %v171
    %v256 = vmul.f32 %v88, %v172
    %v257 = vmul.f32 %v89, %v173
    %v258 = vmul.f32 %v90, %v174
    %v259 = vmul.f32 %v91, %v175
    %v260 = vmul.f32 %v92, %v176
    %v261 = vmul.f32 %v93, %v177
    %v262 = vmul.f32 %v94, %v178
    %v263 = vmul.f32 %v95, %v179
    %v264 = vmul.f32 %v96, %v180
    %v265 = vmul.f32 %v97, %v181
    %v266 = vmul.f32 %v98, %v182
    %v267 = vmul.f32 %v99, %v183
    %v268 = vmul.f32 %v100, %v184
    %v269 = vmul.f32 %v101, %v185
    %v270 = vmul.f32 %v102, %v186
    %v271 = vmul.f32 %v103, %v187
    %v272 = vmul.f32 %v104, %v188
    %v273 = vmul.f32 %v105, %v189
    %v274 = vmul.f32 %v106, %v190
    %v275 = vmul.f32 %v107, %v191
    %v276 = vmul.f32 %v108, %v192
    %v277 = vmul.f32 %v109, %v193
    %v278 = vmul.f32 %v110, %v194
    %v279 = vmul.f32 %v111, %v195
    %v280 = vmul.f32 %v112, %v196
    %v281 = vmul.f32 %v113, %v197
    %v282 = vmul.f32 %v114, %v198
    %v283 = vmul.f32 %v115, %v199
    %v284 = vmul.f32 %v116, %v200
    %v285 = vmul.f32 %v117, %v201
    %v286 = vmul.f32 %v118, %v202
    %v287 = vmul.f32 %v119, %v203
    %v288 = vmul.f32 %v120, %v204
    %v289 = vmul.f32 %v121, %v205
    %v290 = vmul.f32 %v122, %v206
    %v291 = vmul.f32 %v123, %v207
    %v292 = vmul.f32 %v124, %v208
    %v293 = vmul.f32 %v125, %v209
    %v294 = vmul.f32 %v126, %v210
    %v295 = vmul.f32 %v127, %v211
    %v296 = vmul.f32 %v128, %v212
    %v297 = vmul.f32 %v129, %v213
    %v298 = vmul.f32 %v130, %v214
    %v299 = vmul.f32 %v131, %v215
    %v300 = vmul.f32 %v132, %v216
    %v301 = vmul.f32 %v133, %v217
    %v302 = vmul.f32 %v134, %v218
    %v303 = vmul.f32 %v135, %v219
    %v304 = vmul.f32 %v136, %v220
    %v305 = vmul.f32 %v137, %v221
    %v306 = vmul.f32 %v138, %v222
    %v307 = vmul.f32 %v139, %v223
    %v308 = vmul.f32 %v140, %v224
    %v309 = vmul.f32 %v141, %v225
    %v310 = vmul.f32 %v142, %v226
    %v311 = vmul.f32 %v143, %v227
    %v312 = vmul.f32 %v144, %v228
    %v313 = vadd.f32 %v229, %v233
    %v314 = vadd.f32 %v313, %v237
    %v315 = vadd.f32 %v314, %v241
    %v316 = vadd.f32 %v315, %v245
    %v317 = vadd.f32 %v316, %v249
    %v318 = vadd.f32 %v317, %v253
    %v319 = vadd.f32 %v318, %v257
    %v320 = vadd.f32 %v319, %v261
    %v321 = vadd.f32 %v320, %v265
    %v322 = vadd.f32 %v321, %v269
    %v323 = vadd.f32 %v322, %v273
    %v324 = vadd.f32 %v323, %v277
    %v325 = vadd.f32 %v324, %v281
    %v326 = vadd.f32 %v325, %v285
    %v327 = vadd.f32 %v326, %v289
    %v328 = vadd.f32 %v327, %v293
    %v329 = vadd.f32 %v328, %v297
    %v330 = vadd.f32 %v329, %v301
    %v331 = vadd.f32 %v330, %v305
    %v332 = vadd.f32 %v331, %v309
    %v333 = vadd.f32 %v230, %v234
    %v334 = vadd.f32 %v333, %v238
    %v335 = vadd.f32 %v334, %v242
    %v336 = vadd.f32 %v335, %v246
    %v337 = vadd.f32 %v336, %v250
    %v338 = vadd.f32 %v337, %v254
    %v339 = vadd.f32 %v338, %v258
    %v340 = vadd.f32 %v339, %v262
    %v341 = vadd.f32 %v340, %v266
    %v342 = vadd.f32 %v341, %v270
    %v343 = vadd.f32 %v342, %v274
    %v344 = vadd.f32 %v343, %v278
    %v345 = vadd.f32 %v344, %v282
    %v346 = vadd.f32 %v345, %v286
    %v347 = vadd.f32 %v346, %v290
    %v348 = vadd.f32 %v347, %v294
    %v349 = vadd.f32 %v348, %v298
    %v350 = vadd.f32 %v349, %v302
    %v351 = vadd.f32 %v350, %v306
    %v352 = vadd.f32 %v351, %v310
    %v353 = vadd.f32 %v231, %v235
    %v354 = vadd.f32 %v353, %v239
    %v355 = vadd.f32 %v354, %v243
    %v356 = vadd.f32 %v355, %v247
    %v357 = vadd.f32 %v356, %v251
    %v358 = vadd.f32 %v357, %v255
    %v359 = vadd.f32 %v358, %v259
    %v360 = vadd.f32 %v359, %v263
    %v361 = vadd.f32 %v360, %v267
    %v362 = vadd.f32 %v361, %v271
    %v363 = vadd.f32 %v362, %v275
    %v364 = vadd.f32 %v363, %v279
    %v365 = vadd.f32 %v364, %v283
    %v366 = vadd.f32 %v365, %v287
    %v367 = vadd.f32 %v366, %v291
    %v368 = vadd.f32 %v367, %v295
    %v369 = vadd.f32 %v368, %v299
    %v370 = vadd.f32 %v369, %v303
    %v371 = vadd.f32 %v370, %v307
    %v372 = vadd.f32 %v371, %v311
    %v373 = vadd.f32 %v232, %v236
    %v374 = vadd.f32 %v373, %v240
    %v375 = vadd.f32 %v374, %v244
    %v376 = vadd.f32 %v375, %v248
    %v377 = vadd.f32 %v376, %v252
    %v378 = vadd.f32 %v377, %v256
    %v379 = vadd.f32 %v378, %v260
    %v380 = vadd.f32 %v379, %v264
    %v381 = vadd.f32 %v380, %v268
    %v382 = vadd.f32 %v381, %v272
    %v383 = vadd.f32 %v382, %v276
    %v384 = vadd.f32 %v383, %v280
    %v385 = vadd.f32 %v384, %v284
    %v386 = vadd.f32 %v385, %v288
    %v387 = vadd.f32 %v386, %v292
    %v388 = vadd.f32 %v387, %v296
    %v389 = vadd.f32 %v388, %v300
    %v390 = vadd.f32 %v389, %v304
    %v391 = vadd.f32 %v390, %v308
    %v392 = vadd.f32 %v391, %v312
    %v393 = vadd.f32 %v61, %v145
    %v394 = vadd.f32 %v62, %v146
    %v395 = vadd.f32 %v63, %v147
    %v396 = vadd.f32 %v64, %v148
    %v397 = vadd.f32 %v65, %v149
    %v398 = vadd.f32 %v66, %v150
    %v399 = vadd.f32 %v67, %v151
    %v400 = vadd.f32 %v68, %v152
    %v401 = vadd.f32 %v69, %v153
    %v402 = vadd.f32 %v70, %v154
    %v403 = vadd.f32 %v71, %v155
    %v404 = vadd.f32 %v72, %v156
    %v405 = vadd.f32 %v73, %v157
    %v406 = vadd.f32 %v74, %v158
    %v407 = vadd.f32 %v75, %v159
    %v408 = vadd.f32 %v76, %v160
    %v409 = vadd.f32 %v77, %v161
    %v410 = vadd.f32 %v78, %v162
    %v411 = vadd.f32 %v79, %v163
    %v412 = vadd.f32 %v80, %v164
    %v413 = vadd.f32 %v81, %v165
    %v414 = vadd.f32 %v82, %v166
    %v415 = vadd.f32 %v83, %v167
    %v416 = vadd.f32 %v84, %v168
    %v417 = vadd.f32 %v85, %v169
    %v418 = vadd.f32 %v86, %v170
    %v419 = vadd.f32 %v87, %v171
    %v420 = vadd.f32 %v88, %v172
    %v421 = vadd.f32 %v89, %v173
    %v422 = vadd.f32 %v90, %v174
    %v423 = vadd.f32 %v91, %v175
    %v424 = vadd.f32 %v92, %v176
    %v425 = vadd.f32 %v93, %v177
    %v426 = vadd.f32 %v94, %v178
    %v427 = vadd.f32 %v95, %v179
    %v428 = vadd.f32 %v96, %v180
    %v429 = vadd.f32 %v97, %v181
    %v430 = vadd.f32 %v98, %v182
    %v431 = vadd.f32 %v99, %v183
    %v432 = vadd.f32 %v100, %v184
    %v433 = vadd.f32 %v101, %v185
    %v434 = vadd.f32 %v102, %v186
    %v435 = vadd.f32 %v103, %v187
    %v436 = vadd.f32 %v104, %v188
    %v437 = vadd.f32 %v105, %v189
    %v438 = vadd.f32 %v106, %v190
    %v439 = vadd.f32 %v107, %v191
    %v440 = vadd.f32 %v108, %v192
    %v441 = vadd.f32 %v109, %v193
    %v442 = vadd.f32 %v110, %v194
    %v443 = vadd.f32 %v111, %v195
    %v444 = vadd.f32 %v112, %v196
    %v445 = vadd.f32 %v113, %v197
    %v446 = vadd.f32 %v114, %v198
    %v447 = vadd.f32 %v115, %v199
    %v448 = vadd.f32 %v116, %v200
    %v449 = vadd.f32 %v117, %v201
    %v450 = vadd.f32 %v118, %v202
    %v451 = vadd.f32 %v119, %v203
    %v452 = vadd.f32 %v120, %v204
    %v453 = vadd.f32 %v121, %v205
    %v454 = vadd.f32 %v122, %v206
    %v455 = vadd.f32 %v123, %v207
    %v456 = vadd.f32 %v124, %v208
    %v457 = vadd.f32 %v125, %v209
    %v458 = vadd.f32 %v126, %v210
    %v459 = vadd.f32 %v127, %v211
    %v460 = vadd.f32 %v128, %v212
    %v461 = vadd.f32 %v129, %v213
    %v462 = vadd.f32 %v130, %v214
    %v463 = vadd.f32 %v131, %v215
    %v464 = vadd.f32 %v132, %v216
    %v465 = vadd.f32 %v133, %v217
    %v466 = vadd.f32 %v134, %v218
    %v467 = vadd.f32 %v135, %v219
    %v468 = vadd.f32 %v136, %v220
    %v469 = vadd.f32 %v137, %v221
    %v470 = vadd.f32 %v138, %v222
    %v471 = vadd.f32 %v139, %v223
    %v472 = vadd.f32 %v140, %v224
    %v473 = vadd.f32 %v141, %v225
    %v474 = vadd.f32 %v142, %v226
    %v475 = vadd.f32 %v143, %v227
    %v476 = vadd.f32 %v144, %v228
    %v477 = vadd.f32 %v393, %v397
    %v478 = vadd.f32 %v477, %v401
    %v479 = vadd.f32 %v478, %v405
    %v480 = vadd.f32 %v479, %v409
    %v481 = vadd.f32 %v480, %v413
    %v482 = vadd.f32 %v481, %v417
    %v483 = vadd.f32 %v482, %v421
    %v484 = vadd.f32 %v483, %v425
    %v485 = vadd.f32 %v484, %v429
    %v486 = vadd.f32 %v485, %v433
    %v487 = vadd.f32 %v486, %v437
    %v488 = vadd.f32 %v487, %v441
    %v489 = vadd.f32 %v488, %v445
    %v490 = vadd.f32 %v489, %v449
    %v491 = vadd.f32 %v490, %v453
    %v492 = vadd.f32 %v491, %v457
    %v493 = vadd.f32 %v492, %v461
    %v494 = vadd.f32 %v493, %v465
    %v495 = vadd.f32 %v494, %v469
    %v496 = vadd.f32 %v495, %v473
    %v497 = vadd.f32 %v394, %v398
    %v498 = vadd.f32 %v497, %v402
    %v499 = vadd.f32 %v498, %v406
    %v500 = vadd.f32 %v499, %v410
    %v501 = vadd.f32 %v500, %v414
    %v502 = vadd.f32 %v501, %v418
    %v503 = vadd.f32 %v502, %v422
    %v504 = vadd.f32 %v503, %v426
    %v505 = vadd.f32 %v504, %v430
    %v506 = vadd.f32 %v505, %v434
    %v507 = vadd.f32 %v506, %v438
    %v508 = vadd.f32 %v507, %v442
    %v509 = vadd.f32 %v508, %v446
    %v510 = vadd.f32 %v509, %v450
    %v511 = vadd.f32 %v510, %v454
    %v512 = vadd.f32 %v511, %v458
    %v513 = vadd.f32 %v512, %v462
    %v514 = vadd.f32 %v513, %v466
    %v515 = vadd.f32 %v514, %v470
    %v516 = vadd.f32 %v515, %v474
    %v517 = vadd.f32 %v395, %v399
    %v518 = vadd.f32 %v517, %v403
    %v519 = vadd.f32 %v518, %v407
    %v520 = vadd.f32 %v519, %v411
    %v521 = vadd.f32 %v520, %v415
    %v522 = vadd.f32 %v521, %v419
    %v523 = vadd.f32 %v522, %v423
    %v524 = vadd.f32 %v523, %v427
    %v525 = vadd.f32 %v524, %v431
    %v526 = vadd.f32 %v525, %v435
    %v527 = vadd.f32 %v526, %v439
    %v528 = vadd.f32 %v527, %v443
    %v529 = vadd.f32 %v528, %v447
    %v530 = vadd.f32 %v529, %v451
    %v531 = vadd.f32 %v530, %v455
    %v532 = vadd.f32 %v531, %v459
    %v533 = vadd.f32 %v532, %v463
    %v534 = vadd.f32 %v533, %v467
    %v535 = vadd.f32 %v534, %v471
    %v536 = vadd.f32 %v535, %v475
    %v537 = vadd.f32 %v396, %v400
    %v538 = vadd.f32 %v537, %v404
    %v539 = vadd.f32 %v538, %v408
    %v540 = vadd.f32 %v539, %v412
    %v541 = vadd.f32 %v540, %v416
    %v542 = vadd.f32 %v541, %v420
    %v543 = vadd.f32 %v542, %v424
    %v544 = vadd.f32 %v543, %v428
    %v545 = vadd.f32 %v544, %v432
    %v546 = vadd.f32 %v545, %v436
    %v547 = vadd.f32 %v546, %v440
    %v548 = vadd.f32 %v547, %v444
    %v549 = vadd.f32 %v548, %v448
    %v550 = vadd.f32 %v549, %v452
    %v551 = vadd.f32 %v550, %v456
    %v552 = vadd.f32 %v551, %v460
    %v553 = vadd.f32 %v552, %v464
    %v554 = vadd.f32 %v553, %v468
    %v555 = vadd.f32 %v554, %v472
    %v556 = vadd.f32 %v555, %v476
    %v557 = vld [vmem:[#allocation7] sm:$0xff]
    %v558 = vadd.f32 %v332, %v352
    %v559 = vadd.f32 %v558, %v372
    %v560 = vadd.f32 %v559, %v392
    %v561 = vadd.f32 %v557, %v560
    %562 = vst [vmem:[#allocation7] sm:$0xff] %v561
    %v563 = vld [vmem:[#allocation8] sm:$0xff]
    %v564 = vadd.f32 %v496, %v516
    %v565 = vadd.f32 %v564, %v536
    %v566 = vadd.f32 %v565, %v556
    %v567 = vadd.f32 %v563, %v566
    %568 = vst [vmem:[#allocation8] sm:$0xff] %v567
    // Predicated region
    $region22: #{tpu_custom_call.1} parent=1 // pred_check
      _
    $region23: #{tpu_custom_call.1} parent=1 // pred_check_branch
      %570 = sbr.rel (0) target = $region25
    $region24: #{tpu_custom_call.1} parent=1 // pred_region
      %s572 = ssub.s32 128, 128
      %573 = vsyncadd [#allocation4], %s572
      %s575 = sshll.u32 [#allocation7], 4
      %s576 = int_to_ptr.vmem [resolvable:$true] %s575
      %578 = dma.vmem_to_hbm [thread:$0]  %s576, 128, %s2, [#allocation4]
    $region25: #{tpu_custom_call.1} parent=1 // pred_fallthru
      _
    // Predicated region
    $region26: #{tpu_custom_call.1} parent=1 // pred_check
      _
    $region27: #{tpu_custom_call.1} parent=1 // pred_check_branch
      %580 = sbr.rel (0) target = $region29
    $region28: #{tpu_custom_call.1} parent=1 // pred_region
      %s582 = ssub.s32 128, 128
      %583 = vsyncadd [#allocation9], %s582
      %s585 = sshll.u32 [#allocation8], 4
      %s586 = int_to_ptr.vmem [resolvable:$true] %s585
      %588 = dma.vmem_to_hbm [thread:$0]  %s586, 128, %s3, [#allocation9]
    $region29: #{tpu_custom_call.1} parent=1 // pred_fallthru
      _
    // Predicated region
    $region30: #{tpu_custom_call.1} parent=1 // pred_check
      _
    $region31: #{tpu_custom_call.1} parent=1 // pred_check_branch
      %590 = sbr.rel (0) target = $region33
    $region32: #{tpu_custom_call.1} parent=1 // pred_region
      %591 = dma.done [#allocation4], 128
    $region33: #{tpu_custom_call.1} parent=1 // pred_fallthru
      _
    // Predicated region
    $region34: #{tpu_custom_call.1} parent=1 // pred_check
      _
    $region35: #{tpu_custom_call.1} parent=1 // pred_check_branch
      %593 = sbr.rel (0) target = $region37
    $region36: #{tpu_custom_call.1} parent=1 // pred_region
      %594 = dma.done [#allocation9], 128
    $region37: #{tpu_custom_call.1} parent=1 // pred_fallthru
      _
    %595 = vsyncpa [#allocation3], 1
    %596 = vsyncpa [#allocation6], 1
    %597 = vsyncpa [#allocation4], 1
    %598 = vsyncpa [#allocation9], 1

</llo_original>
